<compile_context>
chip_gen: v6e
topology: v6e:2x2x1
jax: 0.10.0
libtpu: 0.0.40
codegen_flags: <defaults>
</compile_context>

<pallas_src>
import functools
import math

import jax
import jax.numpy as jnp
from jax.experimental import pallas as pl
from jax.experimental.pallas import tpu as pltpu


# Conservative budgets that fit every generation (v7x has 64 MiB VMEM / TC).
_VMEM_TILE_BUDGET_BYTES = 24 * 1024 * 1024
_VMEM_LIMIT_BYTES = 48 * 1024 * 1024


def _attention_kernel(k_ref, v_ref, q_ref, r_ref, a_ref, amax_ref, *, d, n):
    # k_ref, v_ref: (d, N)   q_ref: (d, tT)   r_ref: (2d, tT)
    k = k_ref[...]
    v = v_ref[...]
    q = q_ref[...]

    scale = 1.0 / math.sqrt(float(d))

    # S = K^T @ Q / sqrt(d) -> (N, tT).  Contract dim 0 of both operands so the
    # MXU consumes K directly (no explicit XLU transpose / extra VMEM copy).
    s = jax.lax.dot_general(
        k, q,
        dimension_numbers=(((0,), (0,)), ((), ())),
        preferred_element_type=jnp.float32,
    ) * scale

    # Softmax over the N axis (torch dim=1 of (B, N, T)).
    s_max = jnp.max(s, axis=0, keepdims=True)
    e = jnp.exp(s - s_max)
    denom = jnp.sum(e, axis=0, keepdims=True)
    a = e * pl.reciprocal(denom, approx=True)   # denom > 0; EUP vrcp slot

    # R = V @ A -> (d, tT) on the MXU.  R_ = [R; Q]: write both halves of the
    # (2d, tT) output tile directly — no wrapper concat, no HBM round-trip of R.
    r = jnp.dot(v, a, preferred_element_type=jnp.float32)
    r_ref[0:d, :] = r.astype(r_ref.dtype)
    r_ref[d:, :] = q.astype(r_ref.dtype)

    a_ref[...] = a.astype(a_ref.dtype)

    # argmax over N.  argmax(softmax(s)) == argmax(s); reuse s_max instead of
    # re-reducing a (saves a full XLU max pass).  First-max-index tie-breaking
    # matches jnp/torch argmax.
    row_idx = jax.lax.broadcasted_iota(jnp.int32, s.shape, 0)
    amax = jnp.min(jnp.where(s == s_max, row_idx, jnp.int32(n)),
                   axis=0, keepdims=True)
    amax_ref[...] = amax.astype(jnp.int32)


def _pick_block_t(T, d, N):
    """Largest lane-aligned (multiple of 128) T tile whose double-buffered VMEM
    footprint fits the budget; falls back to the full extent for small /
    unaligned T (full-extent blocks are always legal)."""
    if T <= 128 or T % 128 != 0:
        return T
    # f32 bytes per unit of T (Q in + R_ out + A out + amax out), double buffered.
    bytes_per_t = 2 * 4 * (d + 2 * d + N + 1)
    fixed = 2 * 4 * (2 * d * N)                         # resident K + V tiles
    budget = max(_VMEM_TILE_BUDGET_BYTES - fixed, 128 * bytes_per_t)
    tile = min((budget // bytes_per_t) // 128 * 128, T)
    tile = max(tile, 128)
    while T % tile != 0:                                # keep the grid exact
        tile -= 128
    return tile


def attention_net(K, V, Q):
    """K, V: (B, d, N) float32; Q: (B, d, T) float32.

    Returns (R_, A, maxAtt) with shapes (B, 2d, T), (B, N, T), (B, T)."""
    B, d, N = K.shape
    T = Q.shape[2]

    tT = _pick_block_t(T, d, N)
    grid = (B, pl.cdiv(T, tT))

    kernel = functools.partial(_attention_kernel, d=d, n=N)

    cost = pl.CostEstimate(
        flops=2 * B * (2 * d * N * T),                  # two matmuls
        transcendentals=B * N * T,                      # exp
        bytes_accessed=4 * (2 * B * d * N               # K, V reads
                            + B * d * T                 # Q read
                            + 2 * B * d * T             # R_ write
                            + B * N * T                 # A write
                            + B * T),                   # maxAtt write
    )

    r_, a, amax = pl.pallas_call(
        kernel,
        out_shape=(
            jax.ShapeDtypeStruct((B, 2 * d, T), jnp.float32),
            jax.ShapeDtypeStruct((B, N, T), jnp.float32),
            jax.ShapeDtypeStruct((B, 1, T), jnp.int32),
        ),
        grid_spec=pltpu.PrefetchScalarGridSpec(
            num_scalar_prefetch=0,
            grid=grid,
            in_specs=[
                # K, V: index_map independent of t -> stay resident per batch.
                pl.BlockSpec((None, d, N), lambda b, t: (b, 0, 0)),
                pl.BlockSpec((None, d, N), lambda b, t: (b, 0, 0)),
                pl.BlockSpec((None, d, tT), lambda b, t: (b, 0, t)),
            ],
            out_specs=[
                pl.BlockSpec((None, 2 * d, tT), lambda b, t: (b, 0, t)),
                pl.BlockSpec((None, N, tT), lambda b, t: (b, 0, t)),
                pl.BlockSpec((None, 1, tT), lambda b, t: (b, 0, t)),
            ],
        ),
        compiler_params=pltpu.CompilerParams(
            dimension_semantics=("parallel", "parallel"),
            vmem_limit_bytes=_VMEM_LIMIT_BYTES,
        ),
        cost_estimate=cost,
    )(K, V, Q)

    return r_, a, amax.reshape(B, T)


def _reference(K, V, Q):
    d = K.shape[1]
    s = jnp.einsum("bdn,bdt->bnt", K, Q) / math.sqrt(float(d))
    a = jax.nn.softmax(s, axis=1)
    r = jnp.einsum("bdn,bnt->bdt", V, a)
    r_ = jnp.concatenate([r, Q], axis=1)
    return r_, a, jnp.argmax(a, axis=1).astype(jnp.int32)


if __name__ == "__main__":
    B, d, N, T = 2, 4, 16, 8  # small shapes consistent with (B, d, N)/(B, d, T)

    key = jax.random.PRNGKey(0)
    kk, kv, kq = jax.random.split(key, 3)
    K = jax.random.normal(kk, (B, d, N), dtype=jnp.float32)
    V = jax.random.normal(kv, (B, d, N), dtype=jnp.float32)
    Q = jax.random.normal(kq, (B, d, T), dtype=jnp.float32)

    R_, A, maxAtt = attention_net(K, V, Q)
    jax.block_until_ready((R_, A, maxAtt))

    R_ref, A_ref, max_ref = _reference(K, V, Q)
    assert R_.shape == (B, 2 * d, T) and A.shape == (B, N, T) and maxAtt.shape == (B, T)
    # Tolerances account for the approx (EUP) reciprocal in the softmax.
    assert jnp.allclose(R_, R_ref, atol=2e-3, rtol=2e-3)
    assert jnp.allclose(A, A_ref, atol=2e-3, rtol=2e-3)
    assert jnp.array_equal(maxAtt, max_ref)

    print("KERNEL_OK")
</pallas_src>

<mosaic_0001>
module attributes {stable_mosaic.version = 11 : i64} {
  func.func @_attention_kernel(%arg0: i32, %arg1: i32, %arg2: memref<1x4x16xf32, #tpu.memory_space<vmem>>, %arg3: memref<1x4x16xf32, #tpu.memory_space<vmem>>, %arg4: memref<1x4x8xf32, #tpu.memory_space<vmem>>, %arg5: memref<1x8x8xf32, #tpu.memory_space<vmem>>, %arg6: memref<1x16x8xf32, #tpu.memory_space<vmem>>, %arg7: memref<1x1x8xi32, #tpu.memory_space<vmem>>) attributes {dimension_semantics = [#tpu.dimension_semantics<parallel>, #tpu.dimension_semantics<parallel>], iteration_bounds = array<i64: 2, 1>, scalar_prefetch = 0 : i64, scratch_operands = 0 : i64, tpu.core_type = #tpu.core_type<tc>, window_params = [{transform_indices = @transform_0, window_bounds = array<i64: 1, 4, 16>}, {transform_indices = @transform_1, window_bounds = array<i64: 1, 4, 16>}, {transform_indices = @transform_2, window_bounds = array<i64: 1, 4, 8>}, {transform_indices = @transform_3, window_bounds = array<i64: 1, 8, 8>}, {transform_indices = @transform_4, window_bounds = array<i64: 1, 16, 8>}, {transform_indices = @transform_5, window_bounds = array<i64: 1, 1, 8>}]} {
    %c0 = arith.constant 0 : index
    %c0_0 = arith.constant 0 : index
    %c0_1 = arith.constant 0 : index
    %0 = vector.load %arg2[%c0, %c0_0, %c0_1] : memref<1x4x16xf32, #tpu.memory_space<vmem>>, vector<1x4x16xf32>
    %1 = vector.shape_cast %0 : vector<1x4x16xf32> to vector<4x16xf32>
    %c0_2 = arith.constant 0 : index
    %c0_3 = arith.constant 0 : index
    %c0_4 = arith.constant 0 : index
    %2 = vector.load %arg3[%c0_2, %c0_3, %c0_4] : memref<1x4x16xf32, #tpu.memory_space<vmem>>, vector<1x4x16xf32>
    %3 = vector.shape_cast %2 : vector<1x4x16xf32> to vector<4x16xf32>
    %c0_5 = arith.constant 0 : index
    %c0_6 = arith.constant 0 : index
    %c0_7 = arith.constant 0 : index
    %4 = vector.load %arg4[%c0_5, %c0_6, %c0_7] : memref<1x4x8xf32, #tpu.memory_space<vmem>>, vector<1x4x8xf32>
    %5 = vector.shape_cast %4 : vector<1x4x8xf32> to vector<4x8xf32>
    %cst = arith.constant dense<0.000000e+00> : vector<16x8xf32>
    %6 = tpu.matmul %1, %5, %cst {dimension_numbers = #tpu.dot_dimension_numbers<[0], [0], [1], [1], [0, 1, 1, 1], [], []>} : vector<4x16xf32>, vector<4x8xf32>, vector<16x8xf32> -> vector<16x8xf32>
    %cst_8 = arith.constant 5.000000e-01 : f32
    %7 = vector.broadcast %cst_8 : f32 to vector<16x8xf32>
    %8 = arith.mulf %6, %7 : vector<16x8xf32>
    %cst_9 = arith.constant dense<0xFF800000> : vector<8xf32>
    %9 = vector.multi_reduction <maximumf>, %8, %cst_9 [0] : vector<16x8xf32> to vector<8xf32>
    %10 = vector.shape_cast %9 : vector<8xf32> to vector<1x8xf32>
    %11 = vector.broadcast %10 : vector<1x8xf32> to vector<16x8xf32>
    %12 = arith.subf %8, %11 : vector<16x8xf32>
    %13 = math.exp %12 : vector<16x8xf32>
    %cst_10 = arith.constant dense<0.000000e+00> : vector<8xf32>
    %14 = vector.multi_reduction <add>, %13, %cst_10 [0] : vector<16x8xf32> to vector<8xf32>
    %15 = vector.shape_cast %14 : vector<8xf32> to vector<1x8xf32>
    %16 = tpu.reciprocal %15 {approx = true} : vector<1x8xf32> -> vector<1x8xf32>
    %17 = vector.broadcast %16 : vector<1x8xf32> to vector<16x8xf32>
    %18 = arith.mulf %13, %17 : vector<16x8xf32>
    %cst_11 = arith.constant dense<0.000000e+00> : vector<4x8xf32>
    %19 = tpu.matmul %3, %18, %cst_11 {dimension_numbers = #tpu.dot_dimension_numbers<[1], [0], [0], [1], [0, 0, 1, 1], [], []>} : vector<4x16xf32>, vector<16x8xf32>, vector<4x8xf32> -> vector<4x8xf32>
    %c0_12 = arith.constant 0 : index
    %c0_13 = arith.constant 0 : index
    %c0_14 = arith.constant 0 : index
    %20 = vector.load %arg5[%c0_12, %c0_13, %c0_14] : memref<1x8x8xf32, #tpu.memory_space<vmem>>, vector<1x4x8xf32>
    %21 = vector.shape_cast %20 : vector<1x4x8xf32> to vector<4x8xf32>
    %22 = vector.shape_cast %19 : vector<4x8xf32> to vector<1x4x8xf32>
    tpu.vector_store %arg5[%c0_12, %c0_13, %c0_14], %22 {strides = array<i32>} : memref<1x8x8xf32, #tpu.memory_space<vmem>>, vector<1x4x8xf32>,
    %c0_15 = arith.constant 0 : index
    %c4 = arith.constant 4 : index
    %c0_16 = arith.constant 0 : index
    %23 = vector.load %arg5[%c0_15, %c4, %c0_16] : memref<1x8x8xf32, #tpu.memory_space<vmem>>, vector<1x4x8xf32>
    %24 = vector.shape_cast %23 : vector<1x4x8xf32> to vector<4x8xf32>
    %25 = vector.shape_cast %5 : vector<4x8xf32> to vector<1x4x8xf32>
    tpu.vector_store %arg5[%c0_15, %c4, %c0_16], %25 {strides = array<i32>} : memref<1x8x8xf32, #tpu.memory_space<vmem>>, vector<1x4x8xf32>,
    %c0_17 = arith.constant 0 : index
    %c0_18 = arith.constant 0 : index
    %c0_19 = arith.constant 0 : index
    %26 = vector.load %arg6[%c0_17, %c0_18, %c0_19] : memref<1x16x8xf32, #tpu.memory_space<vmem>>, vector<1x16x8xf32>
    %27 = vector.shape_cast %26 : vector<1x16x8xf32> to vector<16x8xf32>
    %28 = vector.shape_cast %18 : vector<16x8xf32> to vector<1x16x8xf32>
    tpu.vector_store %arg6[%c0_17, %c0_18, %c0_19], %28 {strides = array<i32>} : memref<1x16x8xf32, #tpu.memory_space<vmem>>, vector<1x16x8xf32>,
    %29 = tpu.iota {dimensions = array<i32: 0>} : vector<16x8xi32>
    %30 = vector.broadcast %10 : vector<1x8xf32> to vector<16x8xf32>
    %31 = arith.cmpf oeq, %8, %30 : vector<16x8xf32>
    %c16_i32 = arith.constant 16 : i32
    %32 = vector.broadcast %c16_i32 : i32 to vector<16x8xi32>
    %33 = arith.select %31, %29, %32 : vector<16x8xi1>, vector<16x8xi32>
    %cst_20 = arith.constant dense<2147483647> : vector<8xi32>
    %34 = vector.multi_reduction <minsi>, %33, %cst_20 [0] : vector<16x8xi32> to vector<8xi32>
    %35 = vector.shape_cast %34 : vector<8xi32> to vector<1x8xi32>
    %c0_21 = arith.constant 0 : index
    %c0_22 = arith.constant 0 : index
    %c0_23 = arith.constant 0 : index
    %36 = vector.load %arg7[%c0_21, %c0_22, %c0_23] : memref<1x1x8xi32, #tpu.memory_space<vmem>>, vector<1x1x8xi32>
    %37 = vector.shape_cast %36 : vector<1x1x8xi32> to vector<1x8xi32>
    %38 = vector.shape_cast %35 : vector<1x8xi32> to vector<1x1x8xi32>
    tpu.vector_store %arg7[%c0_21, %c0_22, %c0_23], %38 {strides = array<i32>} : memref<1x1x8xi32, #tpu.memory_space<vmem>>, vector<1x1x8xi32>,
    return
  }
  func.func @transform_0(%arg0: i32, %arg1: i32) -> (i32, i32, i32) {
    %c0_i32 = arith.constant 0 : i32
    %c0_i32_0 = arith.constant 0 : i32
    %c0_i32_1 = arith.constant 0 : i32
    return %arg0, %c0_i32, %c0_i32_0 : i32, i32, i32
  }
  func.func @transform_1(%arg0: i32, %arg1: i32) -> (i32, i32, i32) {
    %c0_i32 = arith.constant 0 : i32
    %c0_i32_0 = arith.constant 0 : i32
    %c0_i32_1 = arith.constant 0 : i32
    return %arg0, %c0_i32, %c0_i32_0 : i32, i32, i32
  }
  func.func @transform_2(%arg0: i32, %arg1: i32) -> (i32, i32, i32) {
    %c0_i32 = arith.constant 0 : i32
    %c0_i32_0 = arith.constant 0 : i32
    return %arg0, %c0_i32, %arg1 : i32, i32, i32
  }
  func.func @transform_3(%arg0: i32, %arg1: i32) -> (i32, i32, i32) {
    %c0_i32 = arith.constant 0 : i32
    %c0_i32_0 = arith.constant 0 : i32
    return %arg0, %c0_i32, %arg1 : i32, i32, i32
  }
  func.func @transform_4(%arg0: i32, %arg1: i32) -> (i32, i32, i32) {
    %c0_i32 = arith.constant 0 : i32
    %c0_i32_0 = arith.constant 0 : i32
    return %arg0, %c0_i32, %arg1 : i32, i32, i32
  }
  func.func @transform_5(%arg0: i32, %arg1: i32) -> (i32, i32, i32) {
    %c0_i32 = arith.constant 0 : i32
    %c0_i32_0 = arith.constant 0 : i32
    return %arg0, %c0_i32, %arg1 : i32, i32, i32
  }
}

</mosaic_0001>

<llo_original>
// kernel: tpu_custom_call.1
$region0: #{tpu_custom_call.1}
  #allocation0 [shape = 'u32[]', space=smem, size = 0x4, offset = 0x4, fixed_abs, tag = 'smem constant byte address 0x4 - core index']
  #allocation1 [shape = 'u32[144,128]{1,0:T(1,128)}', space=vmem, size = 0x12000, scoped, tag = 'internal scratch']
  %s0 = inlined_call_operand.hbm [shape: f32[2,4,16], index: 0, kind: input, shape index: {}]
  %s1 = inlined_call_operand.hbm [shape: f32[2,4,16], index: 1, kind: input, shape index: {}]
  %s2 = inlined_call_operand.hbm [shape: f32[2,4,8], index: 2, kind: input, shape index: {}]
  %s3 = inlined_call_operand.hbm [shape: f32[2,8,8], index: 3, kind: output, shape index: {0}]
  %s4 = inlined_call_operand.vmem [shape: f32[2,16,8], index: 4, kind: output, shape index: {1}]
  %s5 = inlined_call_operand.hbm [shape: s32[2,1,8], index: 5, kind: output, shape index: {2}]
  %6 = xla_tuple %s3, %s4, %s5
  %s7 = sld [smem:[#allocation0]]
  $region73: #{tpu_custom_call.1} parent=0
    _
  %s9 = ssub.s32 1, %s7
  %s10 = scalar_select 0, %s9, %s7
  $region1: #{tpu_custom_call.1} parent=0
    #allocation2 [shape = 'u8[4096]{0}', space=vmem, size = 0x1000, scoped, tag = 'input window, operand 0']
    #allocation3 [shape = 's32[2]{0}', space=sflag, size = 0x8, scoped, tag = 'scoped memory for tpu_custom_call.1']
    #allocation4 [shape = 's32[2]{0}', space=sflag, size = 0x8, scoped, tag = 'scoped memory for tpu_custom_call.1']
    #allocation5 [shape = 'u8[4096]{0}', space=vmem, size = 0x1000, scoped, tag = 'input window, operand 1']
    #allocation6 [shape = 's32[2]{0}', space=sflag, size = 0x8, scoped, tag = 'scoped memory for tpu_custom_call.1']
    #allocation7 [shape = 'u8[4096]{0}', space=vmem, size = 0x1000, scoped, tag = 'input window, operand 2']
    #allocation8 [shape = 'u8[8192]{0}', space=vmem, size = 0x2000, scoped, tag = 'output window, operand 0']
    #allocation9 [shape = 'u8[1024]{0}', space=vmem, size = 0x400, scoped, tag = 'output window, operand 2']
    #allocation10 [shape = 's32[2]{0}', space=sflag, size = 0x8, scoped, tag = 'scoped memory for tpu_custom_call.1']
    %11 = vsyncpa [#allocation3], 0
    %s12 = scalar_lea.sflag [#allocation3], 1
    %13 = vsyncpa %s12, 0
    %14 = vsyncpa [#allocation6], 0
    %s15 = scalar_lea.sflag [#allocation6], 1
    %16 = vsyncpa %s15, 0
    %17 = vsyncpa [#allocation4], 0
    %s18 = scalar_lea.sflag [#allocation4], 1
    %19 = vsyncpa %s18, 0
    %20 = vsyncpa [#allocation10], 0
    %s21 = scalar_lea.sflag [#allocation10], 1
    %22 = vsyncpa %s21, 0
    loop: start=0, step=1, limit=4
    $region2: #{tpu_custom_call.1} parent=1 // loop_pre_header
      _
    $region3: #{tpu_custom_call.1} parent=1 // loop_header
      %s24 = sphi 0, %s28
      %p25 = scmp.ge.s32.totalorder %s24, 4
      %s31 = sphi 0, %s43
      %s32 = sphi 0, %s39
      %s33 = sphi 0, %s31
      %s34 = sphi 0, %s32
      %s35 = sphi 0, %s33
      %s36 = sphi 0, %s34
      %s46 = sphi 0, %s48
      %s49 = sphi 0, %s46
      %s50 = sphi 0, %s49
      %s66 = sphi 0, %s50
      %s72 = sphi 0, %s74
      %s75 = sphi 0, %s72
      %s76 = sphi 0, %s75
      %s92 = sphi 0, %s76
      %s100 = sphi 0, %s102
      %s103 = sphi 0, %s100
      %s104 = sphi 0, %s103
      %s120 = sphi 0, %s104
      %s128 = sphi 0, %s130
      %s131 = sphi 0, %s128
      %s132 = sphi 0, %s131
      %s148 = sphi 0, %s132
      %s156 = sphi 0, %s158
      %s159 = sphi 0, %s156
      %s160 = sphi 0, %s159
      %s176 = sphi 0, %s160
      %s184 = sphi 0, %s186
      %s187 = sphi 0, %s184
      %s188 = sphi 0, %s187
      %s204 = sphi 0, %s188
    $region4: #{tpu_custom_call.1} parent=1 // loop_header_branch
      %27 = sbr.rel (%p25) target = $region8
    $region5: #{tpu_custom_call.1} parent=1 // loop_body
      %s29 = ssub.s32 %s24, 1
      %s30 = ssub.s32 %s24, 2
      %s37 = sadd.s32 1, %s32
      %p38 = scmp.ge.s32.totalorder %s37, 1
      %s39 = scalar_select %p38, 0, %s37
      %s40 = sadd.s32 1, %s31
      %s41 = scalar_select %p38, %s40, %s31
      %p42 = scmp.ge.s32.totalorder %s41, 2
      %s43 = scalar_select %p42, 0, %s41
      %s44 = ssub.s32 %s31, %s43
      %p45 = scmp.eq.s32.totalorder %s44, 0
      %s47 = sadd.s32 %s46, 1
      %s48 = scalar_select %p45, %s46, %s47
      %p51 = pneg %p45
      %p52 = scmp.eq.s32.totalorder %s24, 1
      %p53 = por %p51, %p52
      %p54 = scmp.ne.s32.totalorder %s46, %s49
      %p55 = scmp.eq.s32.totalorder %s24, 0
      %p56 = por %p54, %p55
      %p57 = scmp.ne.s32.totalorder %s46, %s49
      %p58 = scmp.eq.s32.totalorder %s29, 1
      %p59 = por %p57, %p58
      %p60 = scmp.ne.s32.totalorder %s49, %s50
      %p61 = scmp.eq.s32.totalorder %s29, 0
      %p62 = por %p60, %p61
      %p63 = scmp.ne.s32.totalorder %s49, %s50
      %p64 = scmp.eq.s32.totalorder %s30, 1
      %p65 = por %p63, %p64
      %p67 = scmp.ne.s32.totalorder %s50, %s66
      %p68 = scmp.eq.s32.totalorder %s30, 0
      %p69 = por %p67, %p68
      %s70 = ssub.s32 %s31, %s43
      %p71 = scmp.eq.s32.totalorder %s70, 0
      %s73 = sadd.s32 %s72, 1
      %s74 = scalar_select %p71, %s72, %s73
      %p77 = pneg %p71
      %p78 = scmp.eq.s32.totalorder %s24, 1
      %p79 = por %p77, %p78
      %p80 = scmp.ne.s32.totalorder %s72, %s75
      %p81 = scmp.eq.s32.totalorder %s24, 0
      %p82 = por %p80, %p81
      %p83 = scmp.ne.s32.totalorder %s72, %s75
      %p84 = scmp.eq.s32.totalorder %s29, 1
      %p85 = por %p83, %p84
      %p86 = scmp.ne.s32.totalorder %s75, %s76
      %p87 = scmp.eq.s32.totalorder %s29, 0
      %p88 = por %p86, %p87
      %p89 = scmp.ne.s32.totalorder %s75, %s76
      %p90 = scmp.eq.s32.totalorder %s30, 1
      %p91 = por %p89, %p90
      %p93 = scmp.ne.s32.totalorder %s76, %s92
      %p94 = scmp.eq.s32.totalorder %s30, 0
      %p95 = por %p93, %p94
      %s96 = ssub.s32 %s31, %s43
      %s97 = ssub.s32 %s32, %s39
      %s98 = sor.u32 %s96, %s97
      %p99 = scmp.eq.s32.totalorder %s98, 0
      %s101 = sadd.s32 %s100, 1
      %s102 = scalar_select %p99, %s100, %s101
      %p105 = pneg %p99
      %p106 = scmp.eq.s32.totalorder %s24, 1
      %p107 = por %p105, %p106
      %p108 = scmp.ne.s32.totalorder %s100, %s103
      %p109 = scmp.eq.s32.totalorder %s24, 0
      %p110 = por %p108, %p109
      %p111 = scmp.ne.s32.totalorder %s100, %s103
      %p112 = scmp.eq.s32.totalorder %s29, 1
      %p113 = por %p111, %p112
      %p114 = scmp.ne.s32.totalorder %s103, %s104
      %p115 = scmp.eq.s32.totalorder %s29, 0
      %p116 = por %p114, %p115
      %p117 = scmp.ne.s32.totalorder %s103, %s104
      %p118 = scmp.eq.s32.totalorder %s30, 1
      %p119 = por %p117, %p118
      %p121 = scmp.ne.s32.totalorder %s104, %s120
      %p122 = scmp.eq.s32.totalorder %s30, 0
      %p123 = por %p121, %p122
      %s124 = ssub.s32 %s31, %s43
      %s125 = ssub.s32 %s32, %s39
      %s126 = sor.u32 %s124, %s125
      %p127 = scmp.eq.s32.totalorder %s126, 0
      %s129 = sadd.s32 %s128, 1
      %s130 = scalar_select %p127, %s128, %s129
      %p133 = pneg %p127
      %p134 = scmp.eq.s32.totalorder %s24, 1
      %p135 = por %p133, %p134
      %p136 = scmp.ne.s32.totalorder %s128, %s131
      %p137 = scmp.eq.s32.totalorder %s24, 0
      %p138 = por %p136, %p137
      %p139 = scmp.ne.s32.totalorder %s128, %s131
      %p140 = scmp.eq.s32.totalorder %s29, 1
      %p141 = por %p139, %p140
      %p142 = scmp.ne.s32.totalorder %s131, %s132
      %p143 = scmp.eq.s32.totalorder %s29, 0
      %p144 = por %p142, %p143
      %p145 = scmp.ne.s32.totalorder %s131, %s132
      %p146 = scmp.eq.s32.totalorder %s30, 1
      %p147 = por %p145, %p146
      %p149 = scmp.ne.s32.totalorder %s132, %s148
      %p150 = scmp.eq.s32.totalorder %s30, 0
      %p151 = por %p149, %p150
      %s152 = ssub.s32 %s31, %s43
      %s153 = ssub.s32 %s32, %s39
      %s154 = sor.u32 %s152, %s153
      %p155 = scmp.eq.s32.totalorder %s154, 0
      %s157 = sadd.s32 %s156, 1
      %s158 = scalar_select %p155, %s156, %s157
      %p161 = pneg %p155
      %p162 = scmp.eq.s32.totalorder %s24, 1
      %p163 = por %p161, %p162
      %p164 = scmp.ne.s32.totalorder %s156, %s159
      %p165 = scmp.eq.s32.totalorder %s24, 0
      %p166 = por %p164, %p165
      %p167 = scmp.ne.s32.totalorder %s156, %s159
      %p168 = scmp.eq.s32.totalorder %s29, 1
      %p169 = por %p167, %p168
      %p170 = scmp.ne.s32.totalorder %s159, %s160
      %p171 = scmp.eq.s32.totalorder %s29, 0
      %p172 = por %p170, %p171
      %p173 = scmp.ne.s32.totalorder %s159, %s160
      %p174 = scmp.eq.s32.totalorder %s30, 1
      %p175 = por %p173, %p174
      %p177 = scmp.ne.s32.totalorder %s160, %s176
      %p178 = scmp.eq.s32.totalorder %s30, 0
      %p179 = por %p177, %p178
      %s180 = ssub.s32 %s31, %s43
      %s181 = ssub.s32 %s32, %s39
      %s182 = sor.u32 %s180, %s181
      %p183 = scmp.eq.s32.totalorder %s182, 0
      %s185 = sadd.s32 %s184, 1
      %s186 = scalar_select %p183, %s184, %s185
      %p189 = pneg %p183
      %p190 = scmp.eq.s32.totalorder %s24, 1
      %p191 = por %p189, %p190
      %p192 = scmp.ne.s32.totalorder %s184, %s187
      %p193 = scmp.eq.s32.totalorder %s24, 0
      %p194 = por %p192, %p193
      %p195 = scmp.ne.s32.totalorder %s184, %s187
      %p196 = scmp.eq.s32.totalorder %s29, 1
      %p197 = por %p195, %p196
      %p198 = scmp.ne.s32.totalorder %s187, %s188
      %p199 = scmp.eq.s32.totalorder %s29, 0
      %p200 = por %p198, %p199
      %p201 = scmp.ne.s32.totalorder %s187, %s188
      %p202 = scmp.eq.s32.totalorder %s30, 1
      %p203 = por %p201, %p202
      %p205 = scmp.ne.s32.totalorder %s188, %s204
      %p206 = scmp.eq.s32.totalorder %s30, 0
      %p207 = por %p205, %p206
      %p208 = scmp.le.s32.totalorder 1, %s24
      %p209 = scmp.lt.s32.totalorder %s24, 3
      %p210 = pnand %p208, %p209
      %p211 = pneg %p210
      // Predicated region
      $region9: #{tpu_custom_call.1} parent=5 // pred_check
        _
      $region10: #{tpu_custom_call.1} parent=5 // pred_check_branch
        %213 = sbr.rel (%p210) target = $region12
      $region11: #{tpu_custom_call.1} parent=5 // pred_region
        %s214 = ssub.s32 %s24, 1
      $region12: #{tpu_custom_call.1} parent=5 // pred_fallthru
        _
      %p215 = scmp.lt.s32.totalorder %s24, 2
      // Predicated region
      $region13: #{tpu_custom_call.1} parent=5 // pred_check
        %p216 = pneg %p215
      $region14: #{tpu_custom_call.1} parent=5 // pred_check_branch
        %218 = sbr.rel (%p216) target = $region16
      $region15: #{tpu_custom_call.1} parent=5 // pred_region
        // Predicated region
        $region17: #{tpu_custom_call.1} parent=15 // pred_check
          %p219 = pneg %p56
        $region18: #{tpu_custom_call.1} parent=15 // pred_check_branch
          %221 = sbr.rel (%p219) target = $region20
        $region19: #{tpu_custom_call.1} parent=15 // pred_region
          %s222 = sand.u32 %s46, 1
          %s223 = scalar_lea.sflag [#allocation3], %s222
          %s224 = sand.u32 %s46, 1
          %s225 = smul.addr %s224, 4
          %s226 = scalar_lea.vmem [#allocation2], %s225
          %s228 = ssub.s32 64, 64
          %229 = vsyncadd %s223, %s228
          %s230 = smul.addr %s31, 64
          %s231 = scalar_lea.hbm %s0, %s230
          %s233 = sshll.u32 %s226, 4
          %s234 = int_to_ptr.vmem [resolvable:$true] %s233
          %236 = dma.hbm_to_vmem [thread:$0]  %s231, 64, %s234, %s223
        $region20: #{tpu_custom_call.1} parent=15 // pred_fallthru
          _
        // Predicated region
        $region21: #{tpu_custom_call.1} parent=15 // pred_check
          %p237 = pneg %p82
        $region22: #{tpu_custom_call.1} parent=15 // pred_check_branch
          %239 = sbr.rel (%p237) target = $region24
        $region23: #{tpu_custom_call.1} parent=15 // pred_region
          %s240 = sand.u32 %s24, 1
          %s241 = scalar_lea.sflag [#allocation6], %s240
          %s242 = sand.u32 %s72, 1
          %s243 = smul.addr %s242, 4
          %s244 = scalar_lea.vmem [#allocation5], %s243
          %s246 = ssub.s32 64, 64
          %247 = vsyncadd %s241, %s246
          %s248 = smul.addr %s31, 64
          %s249 = scalar_lea.hbm %s1, %s248
          %s251 = sshll.u32 %s244, 4
          %s252 = int_to_ptr.vmem [resolvable:$true] %s251
          %254 = dma.hbm_to_vmem [thread:$0]  %s249, 64, %s252, %s241
        $region24: #{tpu_custom_call.1} parent=15 // pred_fallthru
          _
        // Predicated region
        $region25: #{tpu_custom_call.1} parent=15 // pred_check
          %p255 = pneg %p110
        $region26: #{tpu_custom_call.1} parent=15 // pred_check_branch
          %257 = sbr.rel (%p255) target = $region28
        $region27: #{tpu_custom_call.1} parent=15 // pred_region
          %s258 = sand.u32 %s24, 1
          %s259 = scalar_lea.sflag [#allocation6], %s258
          %s260 = sand.u32 %s100, 1
          %s261 = smul.addr %s260, 4
          %s262 = scalar_lea.vmem [#allocation7], %s261
          %s264 = ssub.s32 64, 64
          %265 = vsyncadd %s259, %s264
          %s266 = sadd.s32 %s32, %s31
          %s267 = smul.addr %s266, 64
          %s268 = scalar_lea.hbm %s2, %s267
          %s270 = sshll.u32 %s262, 4
          %s271 = int_to_ptr.vmem [resolvable:$true] %s270
          %273 = dma.hbm_to_vmem [thread:$0]  %s268, 64, %s271, %s259
        $region28: #{tpu_custom_call.1} parent=15 // pred_fallthru
          _
      $region16: #{tpu_custom_call.1} parent=5 // pred_fallthru
        _
      %p274 = scmp.le.s32.totalorder 1, %s24
      %p275 = scmp.lt.s32.totalorder %s24, 3
      %p276 = pnand %p274, %p275
      %p277 = pneg %p276
      // Predicated region
      $region29: #{tpu_custom_call.1} parent=5 // pred_check
        _
      $region30: #{tpu_custom_call.1} parent=5 // pred_check_branch
        %279 = sbr.rel (%p276) target = $region32
      $region31: #{tpu_custom_call.1} parent=5 // pred_region
        %s280 = ssub.s32 %s24, 1
        %s281 = sand.u32 %s49, 1
        %s282 = scalar_lea.sflag [#allocation3], %s281
        %s283 = sand.u32 %s49, 1
        %s284 = smul.addr %s283, 4
        %s285 = scalar_lea.vmem [#allocation2], %s284
        // Predicated region
        $region33: #{tpu_custom_call.1} parent=31 // pred_check
          %p286 = pneg %p62
        $region34: #{tpu_custom_call.1} parent=31 // pred_check_branch
          %288 = sbr.rel (%p286) target = $region36
        $region35: #{tpu_custom_call.1} parent=31 // pred_region
          %289 = dma.done %s282, 64
        $region36: #{tpu_custom_call.1} parent=31 // pred_fallthru
          _
        %s290 = sand.u32 %s29, 1
        %s291 = scalar_lea.sflag [#allocation6], %s290
        %s292 = sand.u32 %s75, 1
        %s293 = smul.addr %s292, 4
        %s294 = scalar_lea.vmem [#allocation5], %s293
        // Predicated region
        $region37: #{tpu_custom_call.1} parent=31 // pred_check
          %p295 = pneg %p88
        $region38: #{tpu_custom_call.1} parent=31 // pred_check_branch
          %297 = sbr.rel (%p295) target = $region40
        $region39: #{tpu_custom_call.1} parent=31 // pred_region
          %298 = dma.done %s291, 64
        $region40: #{tpu_custom_call.1} parent=31 // pred_fallthru
          _
        %s299 = sand.u32 %s29, 1
        %s300 = scalar_lea.sflag [#allocation6], %s299
        %s301 = sand.u32 %s103, 1
        %s302 = smul.addr %s301, 4
        %s303 = scalar_lea.vmem [#allocation7], %s302
        // Predicated region
        $region41: #{tpu_custom_call.1} parent=31 // pred_check
          %p304 = pneg %p116
        $region42: #{tpu_custom_call.1} parent=31 // pred_check_branch
          %306 = sbr.rel (%p304) target = $region44
        $region43: #{tpu_custom_call.1} parent=31 // pred_region
          %307 = dma.done %s300, 64
        $region44: #{tpu_custom_call.1} parent=31 // pred_fallthru
          _
        %s308 = sand.u32 %s49, 1
        %s309 = scalar_lea.sflag [#allocation3], %s308
        %s310 = sand.u32 %s49, 1
        %s311 = smul.addr %s310, 4
        %s312 = scalar_lea.vmem [#allocation2], %s311
        %p313 = pneg %p62
        %p314 = pneg %p59
        %s315 = sand.u32 %s29, 1
        %s316 = scalar_lea.sflag [#allocation6], %s315
        %s317 = sand.u32 %s75, 1
        %s318 = smul.addr %s317, 4
        %s319 = scalar_lea.vmem [#allocation5], %s318
        %p320 = pneg %p88
        %p321 = pneg %p85
        %s322 = sand.u32 %s29, 1
        %s323 = scalar_lea.sflag [#allocation6], %s322
        %s324 = sand.u32 %s103, 1
        %s325 = smul.addr %s324, 4
        %s326 = scalar_lea.vmem [#allocation7], %s325
        %p327 = pneg %p116
        %p328 = pneg %p113
        %p329 = pneg %p144
        %p330 = pneg %p141
        %s331 = sand.u32 %s131, 1
        %s332 = scalar_lea.sflag [#allocation4], %s331
        %s333 = sand.u32 %s131, 1
        %s334 = smul.addr %s333, 8
        %s335 = scalar_lea.vmem [#allocation8], %s334
        %p336 = pneg %p172
        %p337 = pneg %p169
        %p338 = scmp.lt.s32.totalorder %s33, 1
        %s339 = scalar_select %p338, %s33, 1
        %p340 = scmp.lt.s32.totalorder %s34, 0
        %s341 = scalar_select %p340, %s34, 0
        %s342 = smul.addr %s339, 2
        %s343 = sadd.s32 %s341, %s342
        %s344 = smul.addr %s343, 8
        %s345 = scalar_lea.vmem %s4, %s344
        %p346 = pneg %p200
        %p347 = pneg %p197
        %s348 = sand.u32 %s187, 1
        %s349 = scalar_lea.sflag [#allocation10], %s348
        %s350 = sand.u32 %s187, 1
        %s351 = scalar_lea.vmem [#allocation9], %s350
        %p352 = scmp.lt.s32.totalorder %s33, 1
        %s353 = scalar_select %p352, %s33, 1
        %p354 = scmp.lt.s32.totalorder %s34, 0
        %s355 = scalar_select %p354, %s34, 0
        %s356 = smul.addr %s353, 2
        %s357 = sadd.s32 %s355, %s356
        %s358 = smul.addr %s357, 8
        %s359 = scalar_lea.vmem %s4, %s358
        %v360 = vld [vmem:[%s285] sm:$0xf]
        %v361 = vld [vmem:[%s294] sm:$0xf]
        %v362 = vld [vmem:[%s303] sm:$0xf]
        %363 = vxpose.xlu0.b32.start [1/16] %v360, 128
        %364 = vxpose.xlu0.b32.cont [2/16] 0.0, 128
        %365 = vxpose.xlu0.b32.cont [3/16] 0.0, 128
        %366 = vxpose.xlu0.b32.cont [4/16] 0.0, 128
        %367 = vxpose.xlu0.b32.cont [5/16] 0.0, 128
        %368 = vxpose.xlu0.b32.cont [6/16] 0.0, 128
        %369 = vxpose.xlu0.b32.cont [7/16] 0.0, 128
        %370 = vxpose.xlu0.b32.cont [8/16] 0.0, 128
        %371 = vxpose.xlu0.b32.cont [9/16] 0.0, 128
        %372 = vxpose.xlu0.b32.cont [10/16] 0.0, 128
        %373 = vxpose.xlu0.b32.cont [11/16] 0.0, 128
        %374 = vxpose.xlu0.b32.cont [12/16] 0.0, 128
        %375 = vxpose.xlu0.b32.cont [13/16] 0.0, 128
        %376 = vxpose.xlu0.b32.cont [14/16] 0.0, 128
        %377 = vxpose.xlu0.b32.cont [15/16] 0.0, 128
        %378 = vxpose.xlu0.b32.end [16/16] 0.0, 128
        %v379 = vpop.trf.xlu0
        %v380 = vpop.trf.xlu0
        %v381 = vpop.trf.xlu0
        %v382 = vpop.trf.xlu0
        %v383 = vpop.trf.xlu0
        %v384 = vpop.trf.xlu0
        %v385 = vpop.trf.xlu0
        %v386 = vpop.trf.xlu0
        %v387 = vpop.trf.xlu0
        %v388 = vpop.trf.xlu0
        %v389 = vpop.trf.xlu0
        %v390 = vpop.trf.xlu0
        %v391 = vpop.trf.xlu0
        %v392 = vpop.trf.xlu0
        %v393 = vpop.trf.xlu0
        %v394 = vpop.trf.xlu0
        %vm395 = vcmask 31744
        %v397 = vsel %vm395, %v379, 0
        %v400 = vsel %vm395, %v380, 0
        %vm402 = vcmask 1043456
        %v404 = vsel %vm402, %v362, 0
        %406 = vmatprep.subr.mxu0 0.0
        %407 = vmatpush1.msra.mxu0 0.0
        %408 = vmatprep.subr.mxu0 0.0
        %409 = vmatpush1.msra.mxu0 0.0
        %410 = vmatprep.subr.mxu0 0.0
        %411 = vmatpush1.msra.mxu0 0.0
        %412 = vmatprep.subr.mxu0 0.0
        %413 = vmatpush1.msra.mxu0 0.0
        %414 = vmatprep.subr.mxu0 0.0
        %415 = vmatpush1.msra.mxu0 0.0
        %416 = vmatprep.subr.mxu0 0.0
        %417 = vmatpush1.msra.mxu0 0.0
        %418 = vmatprep.subr.mxu0 0.0
        %419 = vmatpush1.msra.mxu0 0.0
        %420 = vmatprep.subr.mxu0 0.0
        %421 = vmatpush1.msra.mxu0 0.0
        %422 = vmatprep.subr.mxu0 0.0
        %423 = vmatpush1.msra.mxu0 0.0
        %424 = vmatprep.subr.mxu0 0.0
        %425 = vmatpush1.msra.mxu0 0.0
        %426 = vmatprep.subr.mxu0 0.0
        %427 = vmatpush1.msra.mxu0 0.0
        %428 = vmatprep.subr.mxu0 0.0
        %429 = vmatpush1.msra.mxu0 0.0
        %430 = vmatprep.subr.mxu0 0.0
        %431 = vmatpush1.msra.mxu0 0.0
        %432 = vmatprep.subr.mxu0 0.0
        %433 = vmatpush1.msra.mxu0 0.0
        %434 = vmatprep.subr.mxu0 0.0
        %435 = vmatpush1.msra.mxu0 0.0
        %436 = vmatprep.subr.mxu0 0.0
        %437 = vmatpush1.msra.mxu0 %v404
        %438 = vmatprep.subr.mxu0 0.0
        %439 = vmatpush2.msra.mxu0 0.0
        %440 = vmatprep.subr.mxu0 0.0
        %441 = vmatpush2.msra.mxu0 0.0
        %442 = vmatprep.subr.mxu0 0.0
        %443 = vmatpush2.msra.mxu0 0.0
        %444 = vmatprep.subr.mxu0 0.0
        %445 = vmatpush2.msra.mxu0 0.0
        %446 = vmatprep.subr.mxu0 0.0
        %447 = vmatpush2.msra.mxu0 0.0
        %448 = vmatprep.subr.mxu0 0.0
        %449 = vmatpush2.msra.mxu0 0.0
        %450 = vmatprep.subr.mxu0 0.0
        %451 = vmatpush2.msra.mxu0 0.0
        %452 = vmatprep.subr.mxu0 0.0
        %453 = vmatpush2.msra.mxu0 0.0
        %454 = vmatprep.subr.mxu0 0.0
        %455 = vmatpush2.msra.mxu0 0.0
        %456 = vmatprep.subr.mxu0 0.0
        %457 = vmatpush2.msra.mxu0 0.0
        %458 = vmatprep.subr.mxu0 0.0
        %459 = vmatpush2.msra.mxu0 0.0
        %460 = vmatprep.subr.mxu0 0.0
        %461 = vmatpush2.msra.mxu0 0.0
        %462 = vmatprep.subr.mxu0 0.0
        %463 = vmatpush2.msra.mxu0 0.0
        %464 = vmatprep.subr.mxu0 0.0
        %465 = vmatpush2.msra.mxu0 0.0
        %466 = vmatprep.subr.mxu0 0.0
        %467 = vmatpush2.msra.mxu0 0.0
        %468 = vmatprep.subr.mxu0 0.0
        %469 = vmatpush2.msra.mxu0 0.0
        %470 = vmatprep.mubr.f32.mxu0 0.0
        %471 = vmatmul.mubr.f32.gmra.mxu0 %v397
        %v472 = vpop.f32.mrf.mxu0
        %v473 = vadd.f32 0.0, %v472
        %v474 = vpop.f32.mrf.mxu0
        %475 = vmatprep.mubr.f32.mxu0 0.0
        %476 = vmatmul.mubr.f32.gmra.mxu0 %v400
        %v477 = vpop.f32.mrf.mxu0
        %v478 = vadd.f32 0.0, %v477
        %v479 = vpop.f32.mrf.mxu0
        %480 = vdwg.mxu0
        %v481 = vmul.f32 %v473, 0.5
        %v482 = vmul.f32 %v478, 0.5
        %vm483 = vcmask 64512
        %v484 = vsel %vm483, %v481, -inf
        %v485 = vsel %vm483, %v482, -inf
        %v486 = vmax.f32 %v484, %v485
        %v487 = vrot.slane %v486, 4
        %v488 = vmax.f32 %v486, %v487
        %v489 = vrot.slane %v488, 2
        %v490 = vmax.f32 %v488, %v489
        %v491 = vrot.slane %v490, 1
        %v492 = vmax.f32 %v490, %v491
        %v493 = vsub.f32 %v481, %v492
        %v494 = vsub.f32 %v482, %v492
        %v495 = vmul.f32 %v493, 1.442695
        %v496 = vpow.pop %v495
        %v497 = vmul.f32 %v494, 1.442695
        %v498 = vpow.pop %v497
        %v499 = vsel %vm483, %v496, 0.0
        %v500 = vsel %vm483, %v498, 0.0
        %v501 = vadd.f32 %v499, %v500
        %v502 = vrot.slane %v501, 4
        %v503 = vadd.f32 %v501, %v502
        %v504 = vrot.slane %v503, 2
        %v505 = vadd.f32 %v503, %v504
        %v506 = vrot.slane %v505, 1
        %v507 = vadd.f32 %v505, %v506
        %v508 = vrcp.pop %v507
        %v509 = vmul.f32 %v496, %v508
        %v510 = vmul.f32 %v498, %v508
        %vm511 = vcmask 130048
        %v513 = vsel %vm511, %v361, 0
        %515 = vmatprep.subr.mxu0 0.0
        %516 = vmatpush1.msra.mxu0 0.0
        %517 = vmatprep.subr.mxu0 0.0
        %518 = vmatpush1.msra.mxu0 0.0
        %519 = vmatprep.subr.mxu0 0.0
        %520 = vmatpush1.msra.mxu0 0.0
        %521 = vmatprep.subr.mxu0 0.0
        %522 = vmatpush1.msra.mxu0 0.0
        %523 = vmatprep.subr.mxu0 0.0
        %524 = vmatpush1.msra.mxu0 0.0
        %525 = vmatprep.subr.mxu0 0.0
        %526 = vmatpush1.msra.mxu0 0.0
        %527 = vmatprep.subr.mxu0 0.0
        %528 = vmatpush1.msra.mxu0 0.0
        %529 = vmatprep.subr.mxu0 0.0
        %530 = vmatpush1.msra.mxu0 0.0
        %531 = vmatprep.subr.mxu0 0.0
        %532 = vmatpush1.msra.mxu0 0.0
        %533 = vmatprep.subr.mxu0 0.0
        %534 = vmatpush1.msra.mxu0 0.0
        %535 = vmatprep.subr.mxu0 0.0
        %536 = vmatpush1.msra.mxu0 0.0
        %537 = vmatprep.subr.mxu0 0.0
        %538 = vmatpush1.msra.mxu0 0.0
        %539 = vmatprep.subr.mxu0 0.0
        %540 = vmatpush1.msra.mxu0 0.0
        %541 = vmatprep.subr.mxu0 0.0
        %542 = vmatpush1.msra.mxu0 0.0
        %543 = vmatprep.subr.mxu0 0.0
        %544 = vmatpush1.msra.mxu0 %v510
        %545 = vmatprep.subr.mxu0 0.0
        %546 = vmatpush1.msra.mxu0 %v509
        %547 = vmatprep.subr.mxu0 0.0
        %548 = vmatpush2.msra.mxu0 0.0
        %549 = vmatprep.subr.mxu0 0.0
        %550 = vmatpush2.msra.mxu0 0.0
        %551 = vmatprep.subr.mxu0 0.0
        %552 = vmatpush2.msra.mxu0 0.0
        %553 = vmatprep.subr.mxu0 0.0
        %554 = vmatpush2.msra.mxu0 0.0
        %555 = vmatprep.subr.mxu0 0.0
        %556 = vmatpush2.msra.mxu0 0.0
        %557 = vmatprep.subr.mxu0 0.0
        %558 = vmatpush2.msra.mxu0 0.0
        %559 = vmatprep.subr.mxu0 0.0
        %560 = vmatpush2.msra.mxu0 0.0
        %561 = vmatprep.subr.mxu0 0.0
        %562 = vmatpush2.msra.mxu0 0.0
        %563 = vmatprep.subr.mxu0 0.0
        %564 = vmatpush2.msra.mxu0 0.0
        %565 = vmatprep.subr.mxu0 0.0
        %566 = vmatpush2.msra.mxu0 0.0
        %567 = vmatprep.subr.mxu0 0.0
        %568 = vmatpush2.msra.mxu0 0.0
        %569 = vmatprep.subr.mxu0 0.0
        %570 = vmatpush2.msra.mxu0 0.0
        %571 = vmatprep.subr.mxu0 0.0
        %572 = vmatpush2.msra.mxu0 0.0
        %573 = vmatprep.subr.mxu0 0.0
        %574 = vmatpush2.msra.mxu0 0.0
        %575 = vmatprep.subr.mxu0 0.0
        %576 = vmatpush2.msra.mxu0 0.0
        %577 = vmatprep.subr.mxu0 0.0
        %578 = vmatpush2.msra.mxu0 0.0
        %579 = vmatprep.mubr.f32.mxu0 0.0
        %580 = vmatmul.mubr.f32.gmra.mxu0 %v513
        %v581 = vpop.f32.mrf.mxu0
        %v582 = vadd.f32 0.0, %v581
        %v583 = vpop.f32.mrf.mxu0
        %584 = vdwg.mxu0
        %vm585 = vcmask 60416
        %586 = vst.msk [vmem:[%s335] sm:$0xf] %vm585, %v582
        %587 = vst.msk [vmem:[%s335 + $0x4] sm:$0xf] %vm585, %v362
        %588 = vst.msk [vmem:[%s359] sm:$0xff] %vm483, %v509
        %589 = vst.msk [vmem:[%s359 + $0x8] sm:$0xff] %vm483, %v510
        %v590 = vlaneseq
        %v591 = vshrl.u32 %v590, 7
        %v592 = vadd.s32 %v591, 8
        %vm593 = vcmp.eq.f32.partialorder %v481, %v492
        %vm594 = vcmp.eq.f32.partialorder %v482, %v492
        %v595 = vsel %vm593, %v591, 16
        %v596 = vsel %vm594, %v592, 16
        %v597 = vsel %vm483, %v595, 2147483647
        %v598 = vsel %vm483, %v596, 2147483647
        %vm599 = vcmp.lt.s32.totalorder %v597, %v598
        %v600 = vsel %vm599, %v597, %v598
        %v601 = vrot.slane %v600, 4
        %vm602 = vcmp.lt.s32.totalorder %v600, %v601
        %v603 = vsel %vm602, %v600, %v601
        %v604 = vrot.slane %v603, 2
        %vm605 = vcmp.lt.s32.totalorder %v603, %v604
        %v606 = vsel %vm605, %v603, %v604
        %v607 = vrot.slane %v606, 1
        %vm608 = vcmp.lt.s32.totalorder %v606, %v607
        %v609 = vsel %vm608, %v606, %v607
        %vm610 = vcmask 57344
        %611 = vst.msk [vmem:[%s351] sm:$0x1] %vm610, %v609
        %s612 = sand.u32 %s131, 1
        %s613 = scalar_lea.sflag [#allocation4], %s612
        %s614 = sand.u32 %s131, 1
        %s615 = smul.addr %s614, 8
        %s616 = scalar_lea.vmem [#allocation8], %s615
        %p617 = scmp.lt.s32.totalorder %s33, 1
        %s618 = scalar_select %p617, %s33, 1
        %p619 = scmp.lt.s32.totalorder %s34, 0
        %s620 = scalar_select %p619, %s34, 0
        %s621 = smul.addr %s618, 2
        %s622 = sadd.s32 %s620, %s621
        %s623 = smul.addr %s622, 8
        %s624 = scalar_lea.vmem %s4, %s623
        %s625 = sand.u32 %s187, 1
        %s626 = scalar_lea.sflag [#allocation10], %s625
        %s627 = sand.u32 %s187, 1
        %s628 = scalar_lea.vmem [#allocation9], %s627
        // Predicated region
        $region45: #{tpu_custom_call.1} parent=31 // pred_check
          %p629 = pneg %p141
        $region46: #{tpu_custom_call.1} parent=31 // pred_check_branch
          %631 = sbr.rel (%p629) target = $region48
        $region47: #{tpu_custom_call.1} parent=31 // pred_region
          %s633 = ssub.s32 128, 128
          %634 = vsyncadd %s613, %s633
          %s635 = sadd.s32 %s34, %s33
          %s636 = smul.addr %s635, 128
          %s637 = scalar_lea.hbm %s3, %s636
          %s639 = sshll.u32 %s616, 4
          %s640 = int_to_ptr.vmem [resolvable:$true] %s639
          %642 = dma.vmem_to_hbm [thread:$0]  %s640, 128, %s637, %s613
        $region48: #{tpu_custom_call.1} parent=31 // pred_fallthru
          _
        // Predicated region
        $region49: #{tpu_custom_call.1} parent=31 // pred_check
          %p643 = pneg %p169
        $region50: #{tpu_custom_call.1} parent=31 // pred_check_branch
          %645 = sbr.rel (%p643) target = $region52
        $region51: #{tpu_custom_call.1} parent=31 // pred_region
          _
        $region52: #{tpu_custom_call.1} parent=31 // pred_fallthru
          _
        // Predicated region
        $region53: #{tpu_custom_call.1} parent=31 // pred_check
          %p646 = pneg %p197
        $region54: #{tpu_custom_call.1} parent=31 // pred_check_branch
          %648 = sbr.rel (%p646) target = $region56
        $region55: #{tpu_custom_call.1} parent=31 // pred_region
          %s650 = ssub.s32 16, 16
          %651 = vsyncadd %s626, %s650
          %s652 = sadd.s32 %s34, %s33
          %s653 = smul.addr %s652, 16
          %s654 = scalar_lea.hbm %s5, %s653
          %s656 = sshll.u32 %s628, 4
          %s657 = int_to_ptr.vmem [resolvable:$true] %s656
          %659 = dma.vmem_to_hbm [thread:$0]  %s657, 16, %s654, %s626
        $region56: #{tpu_custom_call.1} parent=31 // pred_fallthru
          _
      $region32: #{tpu_custom_call.1} parent=5 // pred_fallthru
        _
      %p660 = scmp.le.s32.totalorder 2, %s24
      // Predicated region
      $region57: #{tpu_custom_call.1} parent=5 // pred_check
        %p661 = pneg %p660
      $region58: #{tpu_custom_call.1} parent=5 // pred_check_branch
        %663 = sbr.rel (%p661) target = $region60
      $region59: #{tpu_custom_call.1} parent=5 // pred_region
        %s664 = ssub.s32 %s24, 2
        // Predicated region
        $region61: #{tpu_custom_call.1} parent=59 // pred_check
          %p665 = pneg %p147
        $region62: #{tpu_custom_call.1} parent=59 // pred_check_branch
          %667 = sbr.rel (%p665) target = $region64
        $region63: #{tpu_custom_call.1} parent=59 // pred_region
          %s668 = sand.u32 %s132, 1
          %s669 = scalar_lea.sflag [#allocation4], %s668
          %s670 = sand.u32 %s132, 1
          %s671 = smul.addr %s670, 8
          %s672 = scalar_lea.vmem [#allocation8], %s671
          %673 = dma.done %s669, 128
        $region64: #{tpu_custom_call.1} parent=59 // pred_fallthru
          _
        // Predicated region
        $region65: #{tpu_custom_call.1} parent=59 // pred_check
          %p674 = pneg %p175
        $region66: #{tpu_custom_call.1} parent=59 // pred_check_branch
          %676 = sbr.rel (%p674) target = $region68
        $region67: #{tpu_custom_call.1} parent=59 // pred_region
          %p677 = scmp.lt.s32.totalorder %s35, 1
          %s678 = scalar_select %p677, %s35, 1
          %p679 = scmp.lt.s32.totalorder %s36, 0
          %s680 = scalar_select %p679, %s36, 0
          %s681 = smul.addr %s678, 2
          %s682 = sadd.s32 %s680, %s681
          %s683 = smul.addr %s682, 8
          %s684 = scalar_lea.vmem %s4, %s683
        $region68: #{tpu_custom_call.1} parent=59 // pred_fallthru
          _
        // Predicated region
        $region69: #{tpu_custom_call.1} parent=59 // pred_check
          %p685 = pneg %p203
        $region70: #{tpu_custom_call.1} parent=59 // pred_check_branch
          %687 = sbr.rel (%p685) target = $region72
        $region71: #{tpu_custom_call.1} parent=59 // pred_region
          %s688 = sand.u32 %s188, 1
          %s689 = scalar_lea.sflag [#allocation10], %s688
          %s690 = sand.u32 %s188, 1
          %s691 = scalar_lea.vmem [#allocation9], %s690
          %692 = dma.done %s689, 16
        $region72: #{tpu_custom_call.1} parent=59 // pred_fallthru
          _
      $region60: #{tpu_custom_call.1} parent=5 // pred_fallthru
        _
    $region6: #{tpu_custom_call.1} parent=1 // loop_footer
      %s28 = sadd.s32 1, %s24
    $region7: #{tpu_custom_call.1} parent=1 // loop_footer_branch
      %23 = sbr.rel target = $region3
    $region8: #{tpu_custom_call.1} parent=1 // loop_exit
      _
    %693 = vsyncpa [#allocation3], 1
    %s694 = scalar_lea.sflag [#allocation3], 1
    %695 = vsyncpa %s694, 1
    %696 = vsyncpa [#allocation6], 1
    %s697 = scalar_lea.sflag [#allocation6], 1
    %698 = vsyncpa %s697, 1
    %699 = vsyncpa [#allocation4], 1
    %s700 = scalar_lea.sflag [#allocation4], 1
    %701 = vsyncpa %s700, 1
    %702 = vsyncpa [#allocation10], 1
    %s703 = scalar_lea.sflag [#allocation10], 1
    %704 = vsyncpa %s703, 1

</llo_original>
